<compile_context>
chip_gen: v5e
topology: v5e:2x2
jax: 0.10.0
libtpu: 0.0.40
codegen_flags: <defaults>
</compile_context>

<pallas_src>
import jax
import jax.numpy as jnp
from jax import lax
from jax.experimental import pallas as pl
from jax.experimental.pallas import tpu as pltpu


SUB_ROWS = 16          # sublane rows processed per inner strip (multiple of 8)
MAX_TILE_COLS = 131072 # batch columns per grid step (multiple of 2048)


def _round_up(v, m):
    return ((v + m - 1) // m) * m


def make_mlp_kernel(layer_dims, sub_rows):
    """layer_dims: tuple of (din, dout) per layer.  Weights are PyTorch-style
    [out, in], packed row-major followed by the bias, layer after layer, into
    one flat f32 SMEM array."""
    offsets = []
    off = 0
    for din, dout in layer_dims:
        offsets.append((off, off + din * dout))          # (w_off, b_off)
        off += din * dout + dout
    n_params = off
    n_layers = len(layer_dims)
    din0 = layer_dims[0][0]
    dout_last = layer_dims[-1][1]

    def kernel(p_ref, x_ref, o_ref):
        # p_ref: SMEM [n_params] flat weights+biases (resident, scalar reads)
        # x_ref: VMEM [din0, R, 128]   (batch on sublanes x lanes)
        # o_ref: VMEM [dout_last, R, 128]
        n_rows = x_ref.shape[1]                           # static: tile // 128
        # Hoist every scalar parameter read out of the strip loop.
        p = [p_ref[i] for i in range(n_params)]

        def strip(step, carry):
            r0 = pl.multiple_of(step * sub_rows, sub_rows)
            # Dense [sub_rows, 128] activation slabs -- register resident.
            rows = [x_ref[k, pl.ds(r0, sub_rows), :] for k in range(din0)]
            for li, (din, dout) in enumerate(layer_dims):
                w_off, b_off = offsets[li]
                new_rows = []
                for j in range(dout):
                    acc = rows[0] * p[w_off + j * din]
                    for k in range(1, din):
                        acc = acc + rows[k] * p[w_off + j * din + k]
                    acc = acc + p[b_off + j]
                    if li < n_layers - 1:                 # ReLU on hidden layers
                        acc = jnp.maximum(acc, 0.0)
                    new_rows.append(acc)
                rows = new_rows
            for j in range(dout_last):                    # lane-dense stores
                o_ref[j, pl.ds(r0, sub_rows), :] = rows[j]
            return carry

        lax.fori_loop(0, n_rows // sub_rows, strip, 0)

    return kernel, n_params


def pack_params(params):
    """Flatten w1,b1,...,w4,b4 (PyTorch [out,in] weights) into one f32 vector."""
    pieces = []
    for i in (1, 2, 3, 4):
        pieces.append(params[f"w{i}"].reshape(-1))
        pieces.append(params[f"b{i}"].reshape(-1))
    return jnp.concatenate(pieces).astype(jnp.float32)


def my_model_forward_t(xt, params):
    """Feature-major entry point. xt: [input_dim, N] f32 -> [output_dim, N]."""
    input_dim, n = xt.shape
    layer_dims = tuple(
        (params[f"w{i}"].shape[1], params[f"w{i}"].shape[0]) for i in (1, 2, 3, 4)
    )
    out_dim = layer_dims[-1][1]

    # Batch tile: as large as practical (amortizes per-step overhead), multiple
    # of 2048, capped so double-buffered x stays <= ~8 MiB (v7x VMEM safe),
    # then rebalanced so padding waste stays small.
    tile = min(MAX_TILE_COLS, _round_up(max(n, 1), 2048))
    steps = -(-n // tile)
    tile = _round_up(-(-n // steps), 2048)
    n_pad = steps * tile
    blk = tile // 128

    xt = xt.astype(jnp.float32)
    if n_pad != n:
        xt = jnp.pad(xt, ((0, 0), (0, n_pad - n)))
    xt3 = xt.reshape(input_dim, n_pad // 128, 128)        # free row-major reshape

    flat_params = pack_params(params)
    kernel, n_params = make_mlp_kernel(layer_dims, SUB_ROWS)

    flops_per_col = 2 * sum(di * do for di, do in layer_dims) \
        + 2 * sum(do for _, do in layer_dims)
    cost = pl.CostEstimate(
        flops=flops_per_col * n_pad,
        transcendentals=0,
        bytes_accessed=(input_dim + out_dim) * 4 * n_pad + n_params * 4,
    )

    yt3 = pl.pallas_call(
        kernel,
        out_shape=jax.ShapeDtypeStruct((out_dim, n_pad // 128, 128), jnp.float32),
        grid_spec=pltpu.PrefetchScalarGridSpec(
            num_scalar_prefetch=0,
            grid=(steps,),
            in_specs=[
                # tiny packed weights/biases: SMEM-resident, constant index -> 1 DMA
                pl.BlockSpec(memory_space=pltpu.MemorySpace.SMEM),
                # x streamed in sublane+lane-dense batch tiles
                pl.BlockSpec((input_dim, blk, 128), lambda i: (0, i, 0)),
            ],
            out_specs=pl.BlockSpec((out_dim, blk, 128), lambda i: (0, i, 0)),
        ),
        compiler_params=pltpu.CompilerParams(
            dimension_semantics=("parallel",),            # shard batch over TCs (v7x)
            vmem_limit_bytes=32 * 1024 * 1024,            # safe under v7x 64 MiB VMEM
        ),
        cost_estimate=cost,
    )(flat_params, xt3)

    return yt3.reshape(out_dim, n_pad)[:, :n]


def my_model_forward(x, params):
    """PyTorch-interface wrapper. x: [N, input_dim] f32 -> [N, output_dim]."""
    # TODO(synk): for natural-layout [N, input_dim] inputs this transpose is one
    # extra HBM pass over x; callers that can produce feature-major data should
    # use my_model_forward_t directly (an in-kernel XLU transpose of natural-
    # layout blocks is the alternative but pads the 8-wide lane dim 16x in VMEM).
    yt = my_model_forward_t(jnp.transpose(x), params)
    return jnp.transpose(yt)


def init_params(key, input_dim, output_dim):
    """Deterministic init mimicking nn.Linear (weights stored PyTorch-style [out,in])."""
    dims = [(input_dim, 3), (3, 3), (3, 3), (3, output_dim)]
    params = {}
    for idx, (din, dout) in enumerate(dims, start=1):
        key, kw, kb = jax.random.split(key, 3)
        bound = 1.0 / jnp.sqrt(jnp.float32(din))
        params[f"w{idx}"] = jax.random.uniform(kw, (dout, din), jnp.float32, -bound, bound)
        params[f"b{idx}"] = jax.random.uniform(kb, (dout,), jnp.float32, -bound, bound)
    return params


def reference_forward(x, params):
    h = jnp.maximum(x @ params["w1"].T + params["b1"], 0.0)
    h = jnp.maximum(h @ params["w2"].T + params["b2"], 0.0)
    h = jnp.maximum(h @ params["w3"].T + params["b3"], 0.0)
    return h @ params["w4"].T + params["b4"]


if __name__ == "__main__":
    input_dim = 8     # feature columns (data[:, :-1])
    output_dim = 1    # regression target (data[:, -1:])
    batch = 16

    key = jax.random.PRNGKey(0)
    key, kx = jax.random.split(key)
    x = jax.random.normal(kx, (batch, input_dim), dtype=jnp.float32)
    params = init_params(key, input_dim, output_dim)

    y = my_model_forward(x, params)
    y = jax.block_until_ready(y)

    y_ref = reference_forward(x, params)
    assert y.shape == (batch, output_dim)
    assert jnp.allclose(y, y_ref, atol=1e-5, rtol=1e-5)

    print("KERNEL_OK")
</pallas_src>

<mosaic_0001>
module attributes {stable_mosaic.version = 11 : i64} {
  func.func @kernel(%arg0: i32, %arg1: memref<55xf32, #tpu.memory_space<smem>>, %arg2: memref<8x16x128xf32, #tpu.memory_space<vmem>>, %arg3: memref<1x16x128xf32, #tpu.memory_space<vmem>>) attributes {dimension_semantics = [#tpu.dimension_semantics<parallel>], iteration_bounds = array<i64: 1>, scalar_prefetch = 0 : i64, scratch_operands = 0 : i64, tpu.core_type = #tpu.core_type<tc>, window_params = [{transform_indices = @transform_0, window_bounds = array<i64: 55>}, {transform_indices = @transform_1, window_bounds = array<i64: 8, 16, 128>}, {transform_indices = @transform_2, window_bounds = array<i64: 1, 16, 128>}]} {
    %c0 = arith.constant 0 : index
    %0 = memref.load %arg1[%c0] : memref<55xf32, #tpu.memory_space<smem>>
    %c1 = arith.constant 1 : index
    %1 = memref.load %arg1[%c1] : memref<55xf32, #tpu.memory_space<smem>>
    %c2 = arith.constant 2 : index
    %2 = memref.load %arg1[%c2] : memref<55xf32, #tpu.memory_space<smem>>
    %c3 = arith.constant 3 : index
    %3 = memref.load %arg1[%c3] : memref<55xf32, #tpu.memory_space<smem>>
    %c4 = arith.constant 4 : index
    %4 = memref.load %arg1[%c4] : memref<55xf32, #tpu.memory_space<smem>>
    %c5 = arith.constant 5 : index
    %5 = memref.load %arg1[%c5] : memref<55xf32, #tpu.memory_space<smem>>
    %c6 = arith.constant 6 : index
    %6 = memref.load %arg1[%c6] : memref<55xf32, #tpu.memory_space<smem>>
    %c7 = arith.constant 7 : index
    %7 = memref.load %arg1[%c7] : memref<55xf32, #tpu.memory_space<smem>>
    %c8 = arith.constant 8 : index
    %8 = memref.load %arg1[%c8] : memref<55xf32, #tpu.memory_space<smem>>
    %c9 = arith.constant 9 : index
    %9 = memref.load %arg1[%c9] : memref<55xf32, #tpu.memory_space<smem>>
    %c10 = arith.constant 10 : index
    %10 = memref.load %arg1[%c10] : memref<55xf32, #tpu.memory_space<smem>>
    %c11 = arith.constant 11 : index
    %11 = memref.load %arg1[%c11] : memref<55xf32, #tpu.memory_space<smem>>
    %c12 = arith.constant 12 : index
    %12 = memref.load %arg1[%c12] : memref<55xf32, #tpu.memory_space<smem>>
    %c13 = arith.constant 13 : index
    %13 = memref.load %arg1[%c13] : memref<55xf32, #tpu.memory_space<smem>>
    %c14 = arith.constant 14 : index
    %14 = memref.load %arg1[%c14] : memref<55xf32, #tpu.memory_space<smem>>
    %c15 = arith.constant 15 : index
    %15 = memref.load %arg1[%c15] : memref<55xf32, #tpu.memory_space<smem>>
    %c16 = arith.constant 16 : index
    %16 = memref.load %arg1[%c16] : memref<55xf32, #tpu.memory_space<smem>>
    %c17 = arith.constant 17 : index
    %17 = memref.load %arg1[%c17] : memref<55xf32, #tpu.memory_space<smem>>
    %c18 = arith.constant 18 : index
    %18 = memref.load %arg1[%c18] : memref<55xf32, #tpu.memory_space<smem>>
    %c19 = arith.constant 19 : index
    %19 = memref.load %arg1[%c19] : memref<55xf32, #tpu.memory_space<smem>>
    %c20 = arith.constant 20 : index
    %20 = memref.load %arg1[%c20] : memref<55xf32, #tpu.memory_space<smem>>
    %c21 = arith.constant 21 : index
    %21 = memref.load %arg1[%c21] : memref<55xf32, #tpu.memory_space<smem>>
    %c22 = arith.constant 22 : index
    %22 = memref.load %arg1[%c22] : memref<55xf32, #tpu.memory_space<smem>>
    %c23 = arith.constant 23 : index
    %23 = memref.load %arg1[%c23] : memref<55xf32, #tpu.memory_space<smem>>
    %c24 = arith.constant 24 : index
    %24 = memref.load %arg1[%c24] : memref<55xf32, #tpu.memory_space<smem>>
    %c25 = arith.constant 25 : index
    %25 = memref.load %arg1[%c25] : memref<55xf32, #tpu.memory_space<smem>>
    %c26 = arith.constant 26 : index
    %26 = memref.load %arg1[%c26] : memref<55xf32, #tpu.memory_space<smem>>
    %c27 = arith.constant 27 : index
    %27 = memref.load %arg1[%c27] : memref<55xf32, #tpu.memory_space<smem>>
    %c28 = arith.constant 28 : index
    %28 = memref.load %arg1[%c28] : memref<55xf32, #tpu.memory_space<smem>>
    %c29 = arith.constant 29 : index
    %29 = memref.load %arg1[%c29] : memref<55xf32, #tpu.memory_space<smem>>
    %c30 = arith.constant 30 : index
    %30 = memref.load %arg1[%c30] : memref<55xf32, #tpu.memory_space<smem>>
    %c31 = arith.constant 31 : index
    %31 = memref.load %arg1[%c31] : memref<55xf32, #tpu.memory_space<smem>>
    %c32 = arith.constant 32 : index
    %32 = memref.load %arg1[%c32] : memref<55xf32, #tpu.memory_space<smem>>
    %c33 = arith.constant 33 : index
    %33 = memref.load %arg1[%c33] : memref<55xf32, #tpu.memory_space<smem>>
    %c34 = arith.constant 34 : index
    %34 = memref.load %arg1[%c34] : memref<55xf32, #tpu.memory_space<smem>>
    %c35 = arith.constant 35 : index
    %35 = memref.load %arg1[%c35] : memref<55xf32, #tpu.memory_space<smem>>
    %c36 = arith.constant 36 : index
    %36 = memref.load %arg1[%c36] : memref<55xf32, #tpu.memory_space<smem>>
    %c37 = arith.constant 37 : index
    %37 = memref.load %arg1[%c37] : memref<55xf32, #tpu.memory_space<smem>>
    %c38 = arith.constant 38 : index
    %38 = memref.load %arg1[%c38] : memref<55xf32, #tpu.memory_space<smem>>
    %c39 = arith.constant 39 : index
    %39 = memref.load %arg1[%c39] : memref<55xf32, #tpu.memory_space<smem>>
    %c40 = arith.constant 40 : index
    %40 = memref.load %arg1[%c40] : memref<55xf32, #tpu.memory_space<smem>>
    %c41 = arith.constant 41 : index
    %41 = memref.load %arg1[%c41] : memref<55xf32, #tpu.memory_space<smem>>
    %c42 = arith.constant 42 : index
    %42 = memref.load %arg1[%c42] : memref<55xf32, #tpu.memory_space<smem>>
    %c43 = arith.constant 43 : index
    %43 = memref.load %arg1[%c43] : memref<55xf32, #tpu.memory_space<smem>>
    %c44 = arith.constant 44 : index
    %44 = memref.load %arg1[%c44] : memref<55xf32, #tpu.memory_space<smem>>
    %c45 = arith.constant 45 : index
    %45 = memref.load %arg1[%c45] : memref<55xf32, #tpu.memory_space<smem>>
    %c46 = arith.constant 46 : index
    %46 = memref.load %arg1[%c46] : memref<55xf32, #tpu.memory_space<smem>>
    %c47 = arith.constant 47 : index
    %47 = memref.load %arg1[%c47] : memref<55xf32, #tpu.memory_space<smem>>
    %c48 = arith.constant 48 : index
    %48 = memref.load %arg1[%c48] : memref<55xf32, #tpu.memory_space<smem>>
    %c49 = arith.constant 49 : index
    %49 = memref.load %arg1[%c49] : memref<55xf32, #tpu.memory_space<smem>>
    %c50 = arith.constant 50 : index
    %50 = memref.load %arg1[%c50] : memref<55xf32, #tpu.memory_space<smem>>
    %c51 = arith.constant 51 : index
    %51 = memref.load %arg1[%c51] : memref<55xf32, #tpu.memory_space<smem>>
    %c52 = arith.constant 52 : index
    %52 = memref.load %arg1[%c52] : memref<55xf32, #tpu.memory_space<smem>>
    %c53 = arith.constant 53 : index
    %53 = memref.load %arg1[%c53] : memref<55xf32, #tpu.memory_space<smem>>
    %c54 = arith.constant 54 : index
    %54 = memref.load %arg1[%c54] : memref<55xf32, #tpu.memory_space<smem>>
    %c0_i32 = arith.constant 0 : i32
    %c16_i32 = arith.constant 16 : i32
    %55 = arith.muli %c0_i32, %c16_i32 : i32
    %56 = tpu.assume_multiple %55, 16 : i32
    %c0_0 = arith.constant 0 : index
    %57 = arith.index_cast %56 : i32 to index
    %c0_1 = arith.constant 0 : index
    %58 = vector.load %arg2[%c0_0, %57, %c0_1] : memref<8x16x128xf32, #tpu.memory_space<vmem>>, vector<1x16x128xf32>
    %59 = vector.shape_cast %58 : vector<1x16x128xf32> to vector<16x128xf32>
    %c1_2 = arith.constant 1 : index
    %60 = arith.index_cast %56 : i32 to index
    %c0_3 = arith.constant 0 : index
    %61 = vector.load %arg2[%c1_2, %60, %c0_3] : memref<8x16x128xf32, #tpu.memory_space<vmem>>, vector<1x16x128xf32>
    %62 = vector.shape_cast %61 : vector<1x16x128xf32> to vector<16x128xf32>
    %c2_4 = arith.constant 2 : index
    %63 = arith.index_cast %56 : i32 to index
    %c0_5 = arith.constant 0 : index
    %64 = vector.load %arg2[%c2_4, %63, %c0_5] : memref<8x16x128xf32, #tpu.memory_space<vmem>>, vector<1x16x128xf32>
    %65 = vector.shape_cast %64 : vector<1x16x128xf32> to vector<16x128xf32>
    %c3_6 = arith.constant 3 : index
    %66 = arith.index_cast %56 : i32 to index
    %c0_7 = arith.constant 0 : index
    %67 = vector.load %arg2[%c3_6, %66, %c0_7] : memref<8x16x128xf32, #tpu.memory_space<vmem>>, vector<1x16x128xf32>
    %68 = vector.shape_cast %67 : vector<1x16x128xf32> to vector<16x128xf32>
    %c4_8 = arith.constant 4 : index
    %69 = arith.index_cast %56 : i32 to index
    %c0_9 = arith.constant 0 : index
    %70 = vector.load %arg2[%c4_8, %69, %c0_9] : memref<8x16x128xf32, #tpu.memory_space<vmem>>, vector<1x16x128xf32>
    %71 = vector.shape_cast %70 : vector<1x16x128xf32> to vector<16x128xf32>
    %c5_10 = arith.constant 5 : index
    %72 = arith.index_cast %56 : i32 to index
    %c0_11 = arith.constant 0 : index
    %73 = vector.load %arg2[%c5_10, %72, %c0_11] : memref<8x16x128xf32, #tpu.memory_space<vmem>>, vector<1x16x128xf32>
    %74 = vector.shape_cast %73 : vector<1x16x128xf32> to vector<16x128xf32>
    %c6_12 = arith.constant 6 : index
    %75 = arith.index_cast %56 : i32 to index
    %c0_13 = arith.constant 0 : index
    %76 = vector.load %arg2[%c6_12, %75, %c0_13] : memref<8x16x128xf32, #tpu.memory_space<vmem>>, vector<1x16x128xf32>
    %77 = vector.shape_cast %76 : vector<1x16x128xf32> to vector<16x128xf32>
    %c7_14 = arith.constant 7 : index
    %78 = arith.index_cast %56 : i32 to index
    %c0_15 = arith.constant 0 : index
    %79 = vector.load %arg2[%c7_14, %78, %c0_15] : memref<8x16x128xf32, #tpu.memory_space<vmem>>, vector<1x16x128xf32>
    %80 = vector.shape_cast %79 : vector<1x16x128xf32> to vector<16x128xf32>
    %81 = vector.broadcast %0 : f32 to vector<16x128xf32>
    %82 = arith.mulf %59, %81 : vector<16x128xf32>
    %83 = vector.broadcast %1 : f32 to vector<16x128xf32>
    %84 = arith.mulf %62, %83 : vector<16x128xf32>
    %85 = arith.addf %82, %84 : vector<16x128xf32>
    %86 = vector.broadcast %2 : f32 to vector<16x128xf32>
    %87 = arith.mulf %65, %86 : vector<16x128xf32>
    %88 = arith.addf %85, %87 : vector<16x128xf32>
    %89 = vector.broadcast %3 : f32 to vector<16x128xf32>
    %90 = arith.mulf %68, %89 : vector<16x128xf32>
    %91 = arith.addf %88, %90 : vector<16x128xf32>
    %92 = vector.broadcast %4 : f32 to vector<16x128xf32>
    %93 = arith.mulf %71, %92 : vector<16x128xf32>
    %94 = arith.addf %91, %93 : vector<16x128xf32>
    %95 = vector.broadcast %5 : f32 to vector<16x128xf32>
    %96 = arith.mulf %74, %95 : vector<16x128xf32>
    %97 = arith.addf %94, %96 : vector<16x128xf32>
    %98 = vector.broadcast %6 : f32 to vector<16x128xf32>
    %99 = arith.mulf %77, %98 : vector<16x128xf32>
    %100 = arith.addf %97, %99 : vector<16x128xf32>
    %101 = vector.broadcast %7 : f32 to vector<16x128xf32>
    %102 = arith.mulf %80, %101 : vector<16x128xf32>
    %103 = arith.addf %100, %102 : vector<16x128xf32>
    %104 = vector.broadcast %24 : f32 to vector<16x128xf32>
    %105 = arith.addf %103, %104 : vector<16x128xf32>
    %cst = arith.constant 0.000000e+00 : f32
    %106 = vector.broadcast %cst : f32 to vector<16x128xf32>
    %107 = arith.maximumf %105, %106 : vector<16x128xf32>
    %108 = vector.broadcast %8 : f32 to vector<16x128xf32>
    %109 = arith.mulf %59, %108 : vector<16x128xf32>
    %110 = vector.broadcast %9 : f32 to vector<16x128xf32>
    %111 = arith.mulf %62, %110 : vector<16x128xf32>
    %112 = arith.addf %109, %111 : vector<16x128xf32>
    %113 = vector.broadcast %10 : f32 to vector<16x128xf32>
    %114 = arith.mulf %65, %113 : vector<16x128xf32>
    %115 = arith.addf %112, %114 : vector<16x128xf32>
    %116 = vector.broadcast %11 : f32 to vector<16x128xf32>
    %117 = arith.mulf %68, %116 : vector<16x128xf32>
    %118 = arith.addf %115, %117 : vector<16x128xf32>
    %119 = vector.broadcast %12 : f32 to vector<16x128xf32>
    %120 = arith.mulf %71, %119 : vector<16x128xf32>
    %121 = arith.addf %118, %120 : vector<16x128xf32>
    %122 = vector.broadcast %13 : f32 to vector<16x128xf32>
    %123 = arith.mulf %74, %122 : vector<16x128xf32>
    %124 = arith.addf %121, %123 : vector<16x128xf32>
    %125 = vector.broadcast %14 : f32 to vector<16x128xf32>
    %126 = arith.mulf %77, %125 : vector<16x128xf32>
    %127 = arith.addf %124, %126 : vector<16x128xf32>
    %128 = vector.broadcast %15 : f32 to vector<16x128xf32>
    %129 = arith.mulf %80, %128 : vector<16x128xf32>
    %130 = arith.addf %127, %129 : vector<16x128xf32>
    %131 = vector.broadcast %25 : f32 to vector<16x128xf32>
    %132 = arith.addf %130, %131 : vector<16x128xf32>
    %cst_16 = arith.constant 0.000000e+00 : f32
    %133 = vector.broadcast %cst_16 : f32 to vector<16x128xf32>
    %134 = arith.maximumf %132, %133 : vector<16x128xf32>
    %135 = vector.broadcast %16 : f32 to vector<16x128xf32>
    %136 = arith.mulf %59, %135 : vector<16x128xf32>
    %137 = vector.broadcast %17 : f32 to vector<16x128xf32>
    %138 = arith.mulf %62, %137 : vector<16x128xf32>
    %139 = arith.addf %136, %138 : vector<16x128xf32>
    %140 = vector.broadcast %18 : f32 to vector<16x128xf32>
    %141 = arith.mulf %65, %140 : vector<16x128xf32>
    %142 = arith.addf %139, %141 : vector<16x128xf32>
    %143 = vector.broadcast %19 : f32 to vector<16x128xf32>
    %144 = arith.mulf %68, %143 : vector<16x128xf32>
    %145 = arith.addf %142, %144 : vector<16x128xf32>
    %146 = vector.broadcast %20 : f32 to vector<16x128xf32>
    %147 = arith.mulf %71, %146 : vector<16x128xf32>
    %148 = arith.addf %145, %147 : vector<16x128xf32>
    %149 = vector.broadcast %21 : f32 to vector<16x128xf32>
    %150 = arith.mulf %74, %149 : vector<16x128xf32>
    %151 = arith.addf %148, %150 : vector<16x128xf32>
    %152 = vector.broadcast %22 : f32 to vector<16x128xf32>
    %153 = arith.mulf %77, %152 : vector<16x128xf32>
    %154 = arith.addf %151, %153 : vector<16x128xf32>
    %155 = vector.broadcast %23 : f32 to vector<16x128xf32>
    %156 = arith.mulf %80, %155 : vector<16x128xf32>
    %157 = arith.addf %154, %156 : vector<16x128xf32>
    %158 = vector.broadcast %26 : f32 to vector<16x128xf32>
    %159 = arith.addf %157, %158 : vector<16x128xf32>
    %cst_17 = arith.constant 0.000000e+00 : f32
    %160 = vector.broadcast %cst_17 : f32 to vector<16x128xf32>
    %161 = arith.maximumf %159, %160 : vector<16x128xf32>
    %162 = vector.broadcast %27 : f32 to vector<16x128xf32>
    %163 = arith.mulf %107, %162 : vector<16x128xf32>
    %164 = vector.broadcast %28 : f32 to vector<16x128xf32>
    %165 = arith.mulf %134, %164 : vector<16x128xf32>
    %166 = arith.addf %163, %165 : vector<16x128xf32>
    %167 = vector.broadcast %29 : f32 to vector<16x128xf32>
    %168 = arith.mulf %161, %167 : vector<16x128xf32>
    %169 = arith.addf %166, %168 : vector<16x128xf32>
    %170 = vector.broadcast %36 : f32 to vector<16x128xf32>
    %171 = arith.addf %169, %170 : vector<16x128xf32>
    %cst_18 = arith.constant 0.000000e+00 : f32
    %172 = vector.broadcast %cst_18 : f32 to vector<16x128xf32>
    %173 = arith.maximumf %171, %172 : vector<16x128xf32>
    %174 = vector.broadcast %30 : f32 to vector<16x128xf32>
    %175 = arith.mulf %107, %174 : vector<16x128xf32>
    %176 = vector.broadcast %31 : f32 to vector<16x128xf32>
    %177 = arith.mulf %134, %176 : vector<16x128xf32>
    %178 = arith.addf %175, %177 : vector<16x128xf32>
    %179 = vector.broadcast %32 : f32 to vector<16x128xf32>
    %180 = arith.mulf %161, %179 : vector<16x128xf32>
    %181 = arith.addf %178, %180 : vector<16x128xf32>
    %182 = vector.broadcast %37 : f32 to vector<16x128xf32>
    %183 = arith.addf %181, %182 : vector<16x128xf32>
    %cst_19 = arith.constant 0.000000e+00 : f32
    %184 = vector.broadcast %cst_19 : f32 to vector<16x128xf32>
    %185 = arith.maximumf %183, %184 : vector<16x128xf32>
    %186 = vector.broadcast %33 : f32 to vector<16x128xf32>
    %187 = arith.mulf %107, %186 : vector<16x128xf32>
    %188 = vector.broadcast %34 : f32 to vector<16x128xf32>
    %189 = arith.mulf %134, %188 : vector<16x128xf32>
    %190 = arith.addf %187, %189 : vector<16x128xf32>
    %191 = vector.broadcast %35 : f32 to vector<16x128xf32>
    %192 = arith.mulf %161, %191 : vector<16x128xf32>
    %193 = arith.addf %190, %192 : vector<16x128xf32>
    %194 = vector.broadcast %38 : f32 to vector<16x128xf32>
    %195 = arith.addf %193, %194 : vector<16x128xf32>
    %cst_20 = arith.constant 0.000000e+00 : f32
    %196 = vector.broadcast %cst_20 : f32 to vector<16x128xf32>
    %197 = arith.maximumf %195, %196 : vector<16x128xf32>
    %198 = vector.broadcast %39 : f32 to vector<16x128xf32>
    %199 = arith.mulf %173, %198 : vector<16x128xf32>
    %200 = vector.broadcast %40 : f32 to vector<16x128xf32>
    %201 = arith.mulf %185, %200 : vector<16x128xf32>
    %202 = arith.addf %199, %201 : vector<16x128xf32>
    %203 = vector.broadcast %41 : f32 to vector<16x128xf32>
    %204 = arith.mulf %197, %203 : vector<16x128xf32>
    %205 = arith.addf %202, %204 : vector<16x128xf32>
    %206 = vector.broadcast %48 : f32 to vector<16x128xf32>
    %207 = arith.addf %205, %206 : vector<16x128xf32>
    %cst_21 = arith.constant 0.000000e+00 : f32
    %208 = vector.broadcast %cst_21 : f32 to vector<16x128xf32>
    %209 = arith.maximumf %207, %208 : vector<16x128xf32>
    %210 = vector.broadcast %42 : f32 to vector<16x128xf32>
    %211 = arith.mulf %173, %210 : vector<16x128xf32>
    %212 = vector.broadcast %43 : f32 to vector<16x128xf32>
    %213 = arith.mulf %185, %212 : vector<16x128xf32>
    %214 = arith.addf %211, %213 : vector<16x128xf32>
    %215 = vector.broadcast %44 : f32 to vector<16x128xf32>
    %216 = arith.mulf %197, %215 : vector<16x128xf32>
    %217 = arith.addf %214, %216 : vector<16x128xf32>
    %218 = vector.broadcast %49 : f32 to vector<16x128xf32>
    %219 = arith.addf %217, %218 : vector<16x128xf32>
    %cst_22 = arith.constant 0.000000e+00 : f32
    %220 = vector.broadcast %cst_22 : f32 to vector<16x128xf32>
    %221 = arith.maximumf %219, %220 : vector<16x128xf32>
    %222 = vector.broadcast %45 : f32 to vector<16x128xf32>
    %223 = arith.mulf %173, %222 : vector<16x128xf32>
    %224 = vector.broadcast %46 : f32 to vector<16x128xf32>
    %225 = arith.mulf %185, %224 : vector<16x128xf32>
    %226 = arith.addf %223, %225 : vector<16x128xf32>
    %227 = vector.broadcast %47 : f32 to vector<16x128xf32>
    %228 = arith.mulf %197, %227 : vector<16x128xf32>
    %229 = arith.addf %226, %228 : vector<16x128xf32>
    %230 = vector.broadcast %50 : f32 to vector<16x128xf32>
    %231 = arith.addf %229, %230 : vector<16x128xf32>
    %cst_23 = arith.constant 0.000000e+00 : f32
    %232 = vector.broadcast %cst_23 : f32 to vector<16x128xf32>
    %233 = arith.maximumf %231, %232 : vector<16x128xf32>
    %234 = vector.broadcast %51 : f32 to vector<16x128xf32>
    %235 = arith.mulf %209, %234 : vector<16x128xf32>
    %236 = vector.broadcast %52 : f32 to vector<16x128xf32>
    %237 = arith.mulf %221, %236 : vector<16x128xf32>
    %238 = arith.addf %235, %237 : vector<16x128xf32>
    %239 = vector.broadcast %53 : f32 to vector<16x128xf32>
    %240 = arith.mulf %233, %239 : vector<16x128xf32>
    %241 = arith.addf %238, %240 : vector<16x128xf32>
    %242 = vector.broadcast %54 : f32 to vector<16x128xf32>
    %243 = arith.addf %241, %242 : vector<16x128xf32>
    %c0_24 = arith.constant 0 : index
    %244 = arith.index_cast %56 : i32 to index
    %c0_25 = arith.constant 0 : index
    %245 = vector.load %arg3[%c0_24, %244, %c0_25] : memref<1x16x128xf32, #tpu.memory_space<vmem>>, vector<1x16x128xf32>
    %246 = vector.shape_cast %245 : vector<1x16x128xf32> to vector<16x128xf32>
    %247 = vector.shape_cast %243 : vector<16x128xf32> to vector<1x16x128xf32>
    tpu.vector_store %arg3[%c0_24, %244, %c0_25], %247 {strides = array<i32>} : memref<1x16x128xf32, #tpu.memory_space<vmem>>, vector<1x16x128xf32>,
    %c1_i32 = arith.constant 1 : i32
    return
  }
  func.func @transform_0(%arg0: i32) -> i32 {
    %c0_i32 = arith.constant 0 : i32
    %c0_i32_0 = arith.constant 0 : i32
    return %c0_i32 : i32
  }
  func.func @transform_1(%arg0: i32) -> (i32, i32, i32) {
    %c0_i32 = arith.constant 0 : i32
    %c0_i32_0 = arith.constant 0 : i32
    %c0_i32_1 = arith.constant 0 : i32
    return %c0_i32, %arg0, %c0_i32_0 : i32, i32, i32
  }
  func.func @transform_2(%arg0: i32) -> (i32, i32, i32) {
    %c0_i32 = arith.constant 0 : i32
    %c0_i32_0 = arith.constant 0 : i32
    %c0_i32_1 = arith.constant 0 : i32
    return %c0_i32, %arg0, %c0_i32_0 : i32, i32, i32
  }
}

</mosaic_0001>

<llo_original>
// kernel: tpu_custom_call.1
$region0: #{tpu_custom_call.1}
  #allocation0 [shape = 'u32[]', space=smem, size = 0x4, offset = 0x4, fixed_abs, tag = 'smem constant byte address 0x4 - core index']
  #allocation1 [shape = 'u32[72,128]{1,0:T(1,128)}', space=vmem, size = 0x9000, scoped, tag = 'internal scratch']
  %s0 = inlined_call_operand.hbm [shape: f32[55], index: 0, kind: input, shape index: {}]
  %s1 = inlined_call_operand.hbm [shape: f32[8,16,128], index: 1, kind: input, shape index: {}]
  %s2 = inlined_call_operand.hbm [shape: f32[1,16,128], index: 2, kind: output, shape index: {}]
  %s3 = sld [smem:[#allocation0]]
  $region26: #{tpu_custom_call.1} parent=0
    _
  %s5 = ssub.s32 1, %s3
  %s6 = scalar_select 0, %s5, %s3
  $region1: #{tpu_custom_call.1} parent=0
    #allocation2 [shape = 'u8[512]{0}', space=smem, size = 0x200, scoped, tag = 'input window, operand 0, single buffered']
    #allocation3 [shape = 's32[1]{0}', space=sflag, size = 0x4, scoped, tag = 'scoped memory for tpu_custom_call.1']
    #allocation4 [shape = 's32[1]{0}', space=sflag, size = 0x4, scoped, tag = 'scoped memory for tpu_custom_call.1']
    #allocation5 [shape = 's32[1]{0}', space=sflag, size = 0x4, scoped, tag = 'scoped memory for tpu_custom_call.1']
    #allocation6 [shape = 'u8[65536]{0}', space=vmem, size = 0x10000, scoped, tag = 'input window, operand 1, single buffered']
    #allocation7 [shape = 'u8[8192]{0}', space=vmem, size = 0x2000, scoped, tag = 'output window, operand 0, single buffered']
    %7 = vsyncpa [#allocation5], 0
    %8 = vsyncpa [#allocation3], 0
    %9 = vsyncpa [#allocation4], 0
    // Predicated region
    $region2: #{tpu_custom_call.1} parent=1 // pred_check
      _
    $region3: #{tpu_custom_call.1} parent=1 // pred_check_branch
      %11 = sbr.rel (0) target = $region5
    $region4: #{tpu_custom_call.1} parent=1 // pred_region
      %13 = vsyncadd [#allocation5], 0
      %s15 = sshll.u32 %s0, 4
      %s16 = int_to_ptr.hbm [resolvable:$true] %s15
      %18 = dma.hbm_to_smem %s16, 16, [#allocation2], [#allocation5]
    $region5: #{tpu_custom_call.1} parent=1 // pred_fallthru
      _
    // Predicated region
    $region6: #{tpu_custom_call.1} parent=1 // pred_check
      _
    $region7: #{tpu_custom_call.1} parent=1 // pred_check_branch
      %20 = sbr.rel (0) target = $region9
    $region8: #{tpu_custom_call.1} parent=1 // pred_region
      %22 = vsyncadd [#allocation3], 0
      %s23 = sshll.u32 %s1, 4
      %s24 = int_to_ptr.hbm [resolvable:$true] %s23
      %s25 = sshll.u32 [#allocation6], 4
      %s26 = int_to_ptr.vmem [resolvable:$true] %s25
      %31 = dma.hbm_to_vmem [thread:$0]  %s24, 2048, %s26, [#allocation3], 128, 128, 8
    $region9: #{tpu_custom_call.1} parent=1 // pred_fallthru
      _
    // Predicated region
    $region10: #{tpu_custom_call.1} parent=1 // pred_check
      _
    $region11: #{tpu_custom_call.1} parent=1 // pred_check_branch
      %33 = sbr.rel (0) target = $region13
    $region12: #{tpu_custom_call.1} parent=1 // pred_region
      %35 = dma.done [#allocation5], 16
    $region13: #{tpu_custom_call.1} parent=1 // pred_fallthru
      _
    // Predicated region
    $region14: #{tpu_custom_call.1} parent=1 // pred_check
      _
    $region15: #{tpu_custom_call.1} parent=1 // pred_check_branch
      %37 = sbr.rel (0) target = $region17
    $region16: #{tpu_custom_call.1} parent=1 // pred_region
      %39 = dma.done [#allocation3], 2048
    $region17: #{tpu_custom_call.1} parent=1 // pred_fallthru
      _
    %40 = sfence
    %s41 = sld [smem:[#allocation2]]
    %s42 = sld [smem:[#allocation2 + $0x1]]
    %s43 = sld [smem:[#allocation2 + $0x2]]
    %s44 = sld [smem:[#allocation2 + $0x3]]
    %s45 = sld [smem:[#allocation2 + $0x4]]
    %s46 = sld [smem:[#allocation2 + $0x5]]
    %s47 = sld [smem:[#allocation2 + $0x6]]
    %s48 = sld [smem:[#allocation2 + $0x7]]
    %s49 = sld [smem:[#allocation2 + $0x8]]
    %s50 = sld [smem:[#allocation2 + $0x9]]
    %s51 = sld [smem:[#allocation2 + $0xa]]
    %s52 = sld [smem:[#allocation2 + $0xb]]
    %s53 = sld [smem:[#allocation2 + $0xc]]
    %s54 = sld [smem:[#allocation2 + $0xd]]
    %s55 = sld [smem:[#allocation2 + $0xe]]
    %s56 = sld [smem:[#allocation2 + $0xf]]
    %s57 = sld [smem:[#allocation2 + $0x10]]
    %s58 = sld [smem:[#allocation2 + $0x11]]
    %s59 = sld [smem:[#allocation2 + $0x12]]
    %s60 = sld [smem:[#allocation2 + $0x13]]
    %s61 = sld [smem:[#allocation2 + $0x14]]
    %s62 = sld [smem:[#allocation2 + $0x15]]
    %s63 = sld [smem:[#allocation2 + $0x16]]
    %s64 = sld [smem:[#allocation2 + $0x17]]
    %s65 = sld [smem:[#allocation2 + $0x18]]
    %s66 = sld [smem:[#allocation2 + $0x19]]
    %s67 = sld [smem:[#allocation2 + $0x1a]]
    %s68 = sld [smem:[#allocation2 + $0x1b]]
    %s69 = sld [smem:[#allocation2 + $0x1c]]
    %s70 = sld [smem:[#allocation2 + $0x1d]]
    %s71 = sld [smem:[#allocation2 + $0x1e]]
    %s72 = sld [smem:[#allocation2 + $0x1f]]
    %s73 = sld [smem:[#allocation2 + $0x20]]
    %s74 = sld [smem:[#allocation2 + $0x21]]
    %s75 = sld [smem:[#allocation2 + $0x22]]
    %s76 = sld [smem:[#allocation2 + $0x23]]
    %s77 = sld [smem:[#allocation2 + $0x24]]
    %s78 = sld [smem:[#allocation2 + $0x25]]
    %s79 = sld [smem:[#allocation2 + $0x26]]
    %s80 = sld [smem:[#allocation2 + $0x27]]
    %s81 = sld [smem:[#allocation2 + $0x28]]
    %s82 = sld [smem:[#allocation2 + $0x29]]
    %s83 = sld [smem:[#allocation2 + $0x2a]]
    %s84 = sld [smem:[#allocation2 + $0x2b]]
    %s85 = sld [smem:[#allocation2 + $0x2c]]
    %s86 = sld [smem:[#allocation2 + $0x2d]]
    %s87 = sld [smem:[#allocation2 + $0x2e]]
    %s88 = sld [smem:[#allocation2 + $0x2f]]
    %s89 = sld [smem:[#allocation2 + $0x30]]
    %s90 = sld [smem:[#allocation2 + $0x31]]
    %s91 = sld [smem:[#allocation2 + $0x32]]
    %s92 = sld [smem:[#allocation2 + $0x33]]
    %s93 = sld [smem:[#allocation2 + $0x34]]
    %s94 = sld [smem:[#allocation2 + $0x35]]
    %s95 = sld [smem:[#allocation2 + $0x36]]
    %v96 = vld [vmem:[#allocation6] sm:$0xff]
    %v97 = vld [vmem:[#allocation6 + $0x8] sm:$0xff]
    %s98 = sadd.s32 0, 16
    %s99 = scalar_lea.vmem [#allocation6], %s98
    %v100 = vld [vmem:[%s99] sm:$0xff]
    %v101 = vld [vmem:[%s99 + $0x8] sm:$0xff]
    %s102 = sadd.s32 0, 32
    %s103 = scalar_lea.vmem [#allocation6], %s102
    %v104 = vld [vmem:[%s103] sm:$0xff]
    %v105 = vld [vmem:[%s103 + $0x8] sm:$0xff]
    %s106 = sadd.s32 0, 48
    %s107 = scalar_lea.vmem [#allocation6], %s106
    %v108 = vld [vmem:[%s107] sm:$0xff]
    %v109 = vld [vmem:[%s107 + $0x8] sm:$0xff]
    %s110 = sadd.s32 0, 64
    %s111 = scalar_lea.vmem [#allocation6], %s110
    %v112 = vld [vmem:[%s111] sm:$0xff]
    %v113 = vld [vmem:[%s111 + $0x8] sm:$0xff]
    %s114 = sadd.s32 0, 80
    %s115 = scalar_lea.vmem [#allocation6], %s114
    %v116 = vld [vmem:[%s115] sm:$0xff]
    %v117 = vld [vmem:[%s115 + $0x8] sm:$0xff]
    %s118 = sadd.s32 0, 96
    %s119 = scalar_lea.vmem [#allocation6], %s118
    %v120 = vld [vmem:[%s119] sm:$0xff]
    %v121 = vld [vmem:[%s119 + $0x8] sm:$0xff]
    %s122 = sadd.s32 0, 112
    %s123 = scalar_lea.vmem [#allocation6], %s122
    %v124 = vld [vmem:[%s123] sm:$0xff]
    %v125 = vld [vmem:[%s123 + $0x8] sm:$0xff]
    %v126 = vstv %s41
    %v127 = vmul.f32 %v96, %v126
    %v128 = vmul.f32 %v97, %v126
    %v129 = vstv %s42
    %v130 = vmul.f32 %v100, %v129
    %v131 = vmul.f32 %v101, %v129
    %v132 = vadd.f32 %v127, %v130
    %v133 = vadd.f32 %v128, %v131
    %v134 = vstv %s43
    %v135 = vmul.f32 %v104, %v134
    %v136 = vmul.f32 %v105, %v134
    %v137 = vadd.f32 %v132, %v135
    %v138 = vadd.f32 %v133, %v136
    %v139 = vstv %s44
    %v140 = vmul.f32 %v108, %v139
    %v141 = vmul.f32 %v109, %v139
    %v142 = vadd.f32 %v137, %v140
    %v143 = vadd.f32 %v138, %v141
    %v144 = vstv %s45
    %v145 = vmul.f32 %v112, %v144
    %v146 = vmul.f32 %v113, %v144
    %v147 = vadd.f32 %v142, %v145
    %v148 = vadd.f32 %v143, %v146
    %v149 = vstv %s46
    %v150 = vmul.f32 %v116, %v149
    %v151 = vmul.f32 %v117, %v149
    %v152 = vadd.f32 %v147, %v150
    %v153 = vadd.f32 %v148, %v151
    %v154 = vstv %s47
    %v155 = vmul.f32 %v120, %v154
    %v156 = vmul.f32 %v121, %v154
    %v157 = vadd.f32 %v152, %v155
    %v158 = vadd.f32 %v153, %v156
    %v159 = vstv %s48
    %v160 = vmul.f32 %v124, %v159
    %v161 = vmul.f32 %v125, %v159
    %v162 = vadd.f32 %v157, %v160
    %v163 = vadd.f32 %v158, %v161
    %v164 = vstv %s65
    %v165 = vadd.f32 %v162, %v164
    %v166 = vadd.f32 %v163, %v164
    %v167 = vmax.f32 %v165, 0.0
    %v168 = vmax.f32 %v166, 0.0
    %v169 = vstv %s49
    %v170 = vmul.f32 %v96, %v169
    %v171 = vmul.f32 %v97, %v169
    %v172 = vstv %s50
    %v173 = vmul.f32 %v100, %v172
    %v174 = vmul.f32 %v101, %v172
    %v175 = vadd.f32 %v170, %v173
    %v176 = vadd.f32 %v171, %v174
    %v177 = vstv %s51
    %v178 = vmul.f32 %v104, %v177
    %v179 = vmul.f32 %v105, %v177
    %v180 = vadd.f32 %v175, %v178
    %v181 = vadd.f32 %v176, %v179
    %v182 = vstv %s52
    %v183 = vmul.f32 %v108, %v182
    %v184 = vmul.f32 %v109, %v182
    %v185 = vadd.f32 %v180, %v183
    %v186 = vadd.f32 %v181, %v184
    %v187 = vstv %s53
    %v188 = vmul.f32 %v112, %v187
    %v189 = vmul.f32 %v113, %v187
    %v190 = vadd.f32 %v185, %v188
    %v191 = vadd.f32 %v186, %v189
    %v192 = vstv %s54
    %v193 = vmul.f32 %v116, %v192
    %v194 = vmul.f32 %v117, %v192
    %v195 = vadd.f32 %v190, %v193
    %v196 = vadd.f32 %v191, %v194
    %v197 = vstv %s55
    %v198 = vmul.f32 %v120, %v197
    %v199 = vmul.f32 %v121, %v197
    %v200 = vadd.f32 %v195, %v198
    %v201 = vadd.f32 %v196, %v199
    %v202 = vstv %s56
    %v203 = vmul.f32 %v124, %v202
    %v204 = vmul.f32 %v125, %v202
    %v205 = vadd.f32 %v200, %v203
    %v206 = vadd.f32 %v201, %v204
    %v207 = vstv %s66
    %v208 = vadd.f32 %v205, %v207
    %v209 = vadd.f32 %v206, %v207
    %v210 = vmax.f32 %v208, 0.0
    %v211 = vmax.f32 %v209, 0.0
    %v212 = vstv %s57
    %v213 = vmul.f32 %v96, %v212
    %v214 = vmul.f32 %v97, %v212
    %v215 = vstv %s58
    %v216 = vmul.f32 %v100, %v215
    %v217 = vmul.f32 %v101, %v215
    %v218 = vadd.f32 %v213, %v216
    %v219 = vadd.f32 %v214, %v217
    %v220 = vstv %s59
    %v221 = vmul.f32 %v104, %v220
    %v222 = vmul.f32 %v105, %v220
    %v223 = vadd.f32 %v218, %v221
    %v224 = vadd.f32 %v219, %v222
    %v225 = vstv %s60
    %v226 = vmul.f32 %v108, %v225
    %v227 = vmul.f32 %v109, %v225
    %v228 = vadd.f32 %v223, %v226
    %v229 = vadd.f32 %v224, %v227
    %v230 = vstv %s61
    %v231 = vmul.f32 %v112, %v230
    %v232 = vmul.f32 %v113, %v230
    %v233 = vadd.f32 %v228, %v231
    %v234 = vadd.f32 %v229, %v232
    %v235 = vstv %s62
    %v236 = vmul.f32 %v116, %v235
    %v237 = vmul.f32 %v117, %v235
    %v238 = vadd.f32 %v233, %v236
    %v239 = vadd.f32 %v234, %v237
    %v240 = vstv %s63
    %v241 = vmul.f32 %v120, %v240
    %v242 = vmul.f32 %v121, %v240
    %v243 = vadd.f32 %v238, %v241
    %v244 = vadd.f32 %v239, %v242
    %v245 = vstv %s64
    %v246 = vmul.f32 %v124, %v245
    %v247 = vmul.f32 %v125, %v245
    %v248 = vadd.f32 %v243, %v246
    %v249 = vadd.f32 %v244, %v247
    %v250 = vstv %s67
    %v251 = vadd.f32 %v248, %v250
    %v252 = vadd.f32 %v249, %v250
    %v253 = vmax.f32 %v251, 0.0
    %v254 = vmax.f32 %v252, 0.0
    %v255 = vstv %s68
    %v256 = vmul.f32 %v167, %v255
    %v257 = vmul.f32 %v168, %v255
    %v258 = vstv %s69
    %v259 = vmul.f32 %v210, %v258
    %v260 = vmul.f32 %v211, %v258
    %v261 = vadd.f32 %v256, %v259
    %v262 = vadd.f32 %v257, %v260
    %v263 = vstv %s70
    %v264 = vmul.f32 %v253, %v263
    %v265 = vmul.f32 %v254, %v263
    %v266 = vadd.f32 %v261, %v264
    %v267 = vadd.f32 %v262, %v265
    %v268 = vstv %s77
    %v269 = vadd.f32 %v266, %v268
    %v270 = vadd.f32 %v267, %v268
    %v271 = vmax.f32 %v269, 0.0
    %v272 = vmax.f32 %v270, 0.0
    %v273 = vstv %s71
    %v274 = vmul.f32 %v167, %v273
    %v275 = vmul.f32 %v168, %v273
    %v276 = vstv %s72
    %v277 = vmul.f32 %v210, %v276
    %v278 = vmul.f32 %v211, %v276
    %v279 = vadd.f32 %v274, %v277
    %v280 = vadd.f32 %v275, %v278
    %v281 = vstv %s73
    %v282 = vmul.f32 %v253, %v281
    %v283 = vmul.f32 %v254, %v281
    %v284 = vadd.f32 %v279, %v282
    %v285 = vadd.f32 %v280, %v283
    %v286 = vstv %s78
    %v287 = vadd.f32 %v284, %v286
    %v288 = vadd.f32 %v285, %v286
    %v289 = vmax.f32 %v287, 0.0
    %v290 = vmax.f32 %v288, 0.0
    %v291 = vstv %s74
    %v292 = vmul.f32 %v167, %v291
    %v293 = vmul.f32 %v168, %v291
    %v294 = vstv %s75
    %v295 = vmul.f32 %v210, %v294
    %v296 = vmul.f32 %v211, %v294
    %v297 = vadd.f32 %v292, %v295
    %v298 = vadd.f32 %v293, %v296
    %v299 = vstv %s76
    %v300 = vmul.f32 %v253, %v299
    %v301 = vmul.f32 %v254, %v299
    %v302 = vadd.f32 %v297, %v300
    %v303 = vadd.f32 %v298, %v301
    %v304 = vstv %s79
    %v305 = vadd.f32 %v302, %v304
    %v306 = vadd.f32 %v303, %v304
    %v307 = vmax.f32 %v305, 0.0
    %v308 = vmax.f32 %v306, 0.0
    %v309 = vstv %s80
    %v310 = vmul.f32 %v271, %v309
    %v311 = vmul.f32 %v272, %v309
    %v312 = vstv %s81
    %v313 = vmul.f32 %v289, %v312
    %v314 = vmul.f32 %v290, %v312
    %v315 = vadd.f32 %v310, %v313
    %v316 = vadd.f32 %v311, %v314
    %v317 = vstv %s82
    %v318 = vmul.f32 %v307, %v317
    %v319 = vmul.f32 %v308, %v317
    %v320 = vadd.f32 %v315, %v318
    %v321 = vadd.f32 %v316, %v319
    %v322 = vstv %s89
    %v323 = vadd.f32 %v320, %v322
    %v324 = vadd.f32 %v321, %v322
    %v325 = vmax.f32 %v323, 0.0
    %v326 = vmax.f32 %v324, 0.0
    %v327 = vstv %s83
    %v328 = vmul.f32 %v271, %v327
    %v329 = vmul.f32 %v272, %v327
    %v330 = vstv %s84
    %v331 = vmul.f32 %v289, %v330
    %v332 = vmul.f32 %v290, %v330
    %v333 = vadd.f32 %v328, %v331
    %v334 = vadd.f32 %v329, %v332
    %v335 = vstv %s85
    %v336 = vmul.f32 %v307, %v335
    %v337 = vmul.f32 %v308, %v335
    %v338 = vadd.f32 %v333, %v336
    %v339 = vadd.f32 %v334, %v337
    %v340 = vstv %s90
    %v341 = vadd.f32 %v338, %v340
    %v342 = vadd.f32 %v339, %v340
    %v343 = vmax.f32 %v341, 0.0
    %v344 = vmax.f32 %v342, 0.0
    %v345 = vstv %s86
    %v346 = vmul.f32 %v271, %v345
    %v347 = vmul.f32 %v272, %v345
    %v348 = vstv %s87
    %v349 = vmul.f32 %v289, %v348
    %v350 = vmul.f32 %v290, %v348
    %v351 = vadd.f32 %v346, %v349
    %v352 = vadd.f32 %v347, %v350
    %v353 = vstv %s88
    %v354 = vmul.f32 %v307, %v353
    %v355 = vmul.f32 %v308, %v353
    %v356 = vadd.f32 %v351, %v354
    %v357 = vadd.f32 %v352, %v355
    %v358 = vstv %s91
    %v359 = vadd.f32 %v356, %v358
    %v360 = vadd.f32 %v357, %v358
    %v361 = vmax.f32 %v359, 0.0
    %v362 = vmax.f32 %v360, 0.0
    %v363 = vstv %s92
    %v364 = vmul.f32 %v325, %v363
    %v365 = vmul.f32 %v326, %v363
    %v366 = vstv %s93
    %v367 = vmul.f32 %v343, %v366
    %v368 = vmul.f32 %v344, %v366
    %v369 = vadd.f32 %v364, %v367
    %v370 = vadd.f32 %v365, %v368
    %v371 = vstv %s94
    %v372 = vmul.f32 %v361, %v371
    %v373 = vmul.f32 %v362, %v371
    %v374 = vadd.f32 %v369, %v372
    %v375 = vadd.f32 %v370, %v373
    %v376 = vstv %s95
    %v377 = vadd.f32 %v374, %v376
    %v378 = vadd.f32 %v375, %v376
    %379 = vst [vmem:[#allocation7] sm:$0xff] %v377
    %380 = vst [vmem:[#allocation7 + $0x8] sm:$0xff] %v378
    // Predicated region
    $region18: #{tpu_custom_call.1} parent=1 // pred_check
      _
    $region19: #{tpu_custom_call.1} parent=1 // pred_check_branch
      %382 = sbr.rel (0) target = $region21
    $region20: #{tpu_custom_call.1} parent=1 // pred_region
      %384 = vsyncadd [#allocation4], 0
      %s385 = sshll.u32 [#allocation7], 4
      %s386 = int_to_ptr.vmem [resolvable:$true] %s385
      %s387 = sshll.u32 %s2, 4
      %s388 = int_to_ptr.hbm [resolvable:$true] %s387
      %393 = dma.vmem_to_hbm [thread:$0]  %s386, 256, %s388, [#allocation4], 128, 128, 8
    $region21: #{tpu_custom_call.1} parent=1 // pred_fallthru
      _
    // Predicated region
    $region22: #{tpu_custom_call.1} parent=1 // pred_check
      _
    $region23: #{tpu_custom_call.1} parent=1 // pred_check_branch
      %395 = sbr.rel (0) target = $region25
    $region24: #{tpu_custom_call.1} parent=1 // pred_region
      %397 = dma.done [#allocation4], 256
    $region25: #{tpu_custom_call.1} parent=1 // pred_fallthru
      _
    %398 = vsyncpa [#allocation3], 1
    %399 = vsyncpa [#allocation4], 1
    %400 = vsyncpa [#allocation5], 1

</llo_original>
